<compile_context>
chip_gen: v7x
topology: tpu7x:2x2x1
jax: 0.10.0
libtpu: 0.0.40
codegen_flags: <defaults>
</compile_context>

<pallas_src>
import functools

import jax
import jax.numpy as jnp
from jax import lax
from jax.experimental import pallas as pl
from jax.experimental.pallas import tpu as pltpu

LN_EPS = 1e-5  # torch.nn.LayerNorm default


def _vmem_limit_bytes():
    """Generation-aware scoped VMEM limit: ~48 MiB on v7x, ~96-100 MiB on v5e/v6e."""
    cap = 128 * 1024 * 1024
    try:
        cap = int(pltpu.get_tpu_info().vmem_capacity_bytes)
    except Exception:
        pass
    return min((cap * 3) // 4, 100 * 1024 * 1024)


# --------------------------------------------------------------------------
# Kernel 1: pair bias  (feat_2d_norm + feat_2d_weights projection)
#           emitted flattened as (H, tq*K) bf16, lane-dense unmasked stores.
# --------------------------------------------------------------------------
def _pair_bias_kernel(pair_ref, gamma_ref, beta_ref, wt_ref, out_ref):
    # pair_ref: (tq, K, Cp) f32; gamma/beta: (1, Cp) f32; wt: (H, Cp) bf16
    # out_ref: (H, tq*K) bf16
    tq, kn, cp = pair_ref.shape
    x = pair_ref[...].reshape(tq * kn, cp)

    # LayerNorm; variance via E[x^2] - E[x]^2 (two independent lane reductions,
    # shorter XLU dependency chain than mean -> subtract -> square -> mean).
    mu = jnp.mean(x, axis=-1, keepdims=True)
    m2 = jnp.mean(x * x, axis=-1, keepdims=True)
    var = m2 - mu * mu
    xn = (x - mu) * lax.rsqrt(var + LN_EPS) * gamma_ref[...] + beta_ref[...]

    # Single MXU pass: (H, Cp) x (tq*K, Cp) contracted on Cp -> (H, tq*K).
    # The big tq*K dim feeds the lane dimension; one unmasked lane-dense store.
    y = lax.dot_general(wt_ref[...], xn.astype(jnp.bfloat16),
                        (((1,), (1,)), ((), ())),
                        preferred_element_type=jnp.float32)
    out_ref[...] = y.astype(out_ref.dtype)


# --------------------------------------------------------------------------
# Kernel 2: gated attention with pair bias over a block of R MSA rows
# --------------------------------------------------------------------------
def _row_attention_kernel(num_head, key_dim, value_dim,
                          msa_ref, mask_ref, nb_ref,
                          g_ref, b_ref, qkvg_ref, gb_ref, ow_ref, ob_ref,
                          out_ref):
    ck = num_head * key_dim        # all_key_dim
    cv = num_head * value_dim      # all_value_dim
    R, Q, C = msa_ref.shape
    x = msa_ref[...].reshape(R * Q, C)                            # leading-dim merge (free)

    # query_norm LayerNorm (f32), E[x^2]-E[x]^2 variance.
    mu = jnp.mean(x, axis=-1, keepdims=True)
    m2 = jnp.mean(x * x, axis=-1, keepdims=True)
    var = m2 - mu * mu
    xn = (x - mu) * lax.rsqrt(var + LN_EPS) * g_ref[...] + b_ref[...]

    # One full-depth bf16 MXU pass for Q|K|V|gate over the whole R*Q-row slab
    # (1/sqrt(d) pre-folded into the q weights), f32 accumulation.
    proj = jnp.dot(xn.astype(jnp.bfloat16), qkvg_ref[...],
                   preferred_element_type=jnp.float32)            # (R*Q, 2ck+2cv)
    qb = proj[:, :ck].astype(jnp.bfloat16)
    kb = proj[:, ck:2 * ck].astype(jnp.bfloat16)
    vb = proj[:, 2 * ck:2 * ck + cv].astype(jnp.bfloat16)
    gate = jax.nn.sigmoid(proj[:, 2 * ck + cv:] + gb_ref[...])    # (R*Q, cv) f32

    for r in range(R):                                            # static, small (<=8)
        rows = slice(r * Q, (r + 1) * Q)
        bias_row = 1e9 * (mask_ref[r] - 1.0)                      # (1, Q) f32 (keep f32!)
        acc = None
        for h in range(num_head):                                 # static head loop
            qh = qb[rows, h * key_dim:(h + 1) * key_dim]          # (Q, kd) bf16
            kh = kb[rows, h * key_dim:(h + 1) * key_dim]          # (K, kd) bf16
            vh = vb[rows, h * value_dim:(h + 1) * value_dim]      # (K, vd) bf16
            # Contract on last dims of both operands: no explicit transpose.
            logits = lax.dot_general(qh, kh, (((1,), (1,)), ((), ())),
                                     preferred_element_type=jnp.float32)
            logits = logits + bias_row + nb_ref[h].astype(jnp.float32)
            m = jnp.max(logits, axis=-1, keepdims=True)
            p = jnp.exp(logits - m)
            denom = jnp.sum(p, axis=-1, keepdims=True)
            w = p * pl.reciprocal(denom, approx=True)             # EUP, not VPU divide
            wa = jnp.dot(w.astype(jnp.bfloat16), vh,
                         preferred_element_type=jnp.float32)      # (Q, vd) f32
            gated = wa * gate[rows, h * value_dim:(h + 1) * value_dim]
            # Accumulate directly through this head's (vd, C) output-weight slice:
            # no narrow-lane concatenate; head intermediates die here.
            contrib = jnp.dot(gated.astype(jnp.bfloat16),
                              ow_ref[h * value_dim:(h + 1) * value_dim, :],
                              preferred_element_type=jnp.float32)  # (Q, C)
            acc = contrib if acc is None else acc + contrib
        out_ref[r] = acc + ob_ref[...]


# --------------------------------------------------------------------------
# Wrapper
# --------------------------------------------------------------------------
def msa_row_attention_with_pair_bias(msa_act, msa_mask, pair_act, params, num_head):
    B, Q, C = msa_act.shape
    Qr, Kr, Cp = pair_act.shape
    H = num_head
    key_dim = C // H
    value_dim = C // H
    CK = H * key_dim
    CV = H * value_dim
    vmem_limit = _vmem_limit_bytes()

    # ---- parameter prep (once, outside the hot loops) ----
    scale = key_dim ** (-0.5)
    qw = params['q_w'].reshape(C, CK) * scale        # fold 1/sqrt(d) into weights
    kw = params['k_w'].reshape(C, CK)
    vw = params['v_w'].reshape(C, CV)
    gw = params['gating_w'].reshape(C, CV)
    qkvg = jnp.concatenate([qw, kw, vw, gw], axis=1).astype(jnp.bfloat16)
    gb = params['gating_b'].reshape(1, CV).astype(jnp.float32)
    ow = params['o_w'].reshape(CV, C).astype(jnp.bfloat16)
    ob = params['o_b'].reshape(1, C).astype(jnp.float32)
    qn_g = params['query_norm_w'].reshape(1, C).astype(jnp.float32)
    qn_b = params['query_norm_b'].reshape(1, C).astype(jnp.float32)
    pn_g = params['feat_2d_norm_w'].reshape(1, Cp).astype(jnp.float32)
    pn_b = params['feat_2d_norm_b'].reshape(1, Cp).astype(jnp.float32)
    f2d_t = params['feat_2d_weights'].T.astype(jnp.bfloat16)      # (H, Cp)

    # ---- Kernel 1: pair bias, tiled over query rows, flat (H, Q*K) bf16 ----
    # Largest tile (HBM-read bound) whose flattened lane extent is 128-aligned;
    # otherwise fall back to the full array as a single block.
    tq = next((t for t in (64, 32, 16, 8, 4, 2, 1)
               if Qr % t == 0 and (t * Kr) % 128 == 0), Qr)
    nb_flat = pl.pallas_call(
        _pair_bias_kernel,
        out_shape=jax.ShapeDtypeStruct((H, Qr * Kr), jnp.bfloat16),
        grid=(Qr // tq,),
        in_specs=[
            pl.BlockSpec((tq, Kr, Cp), lambda i: (i, 0, 0)),      # pair rows (streamed)
            pl.BlockSpec((1, Cp), lambda i: (0, 0)),              # LN scale
            pl.BlockSpec((1, Cp), lambda i: (0, 0)),              # LN offset
            pl.BlockSpec((H, Cp), lambda i: (0, 0)),              # feat_2d_weights^T (bf16)
        ],
        out_specs=pl.BlockSpec((H, tq * Kr), lambda i: (0, i)),
        compiler_params=pltpu.CompilerParams(
            dimension_semantics=("parallel",),
            vmem_limit_bytes=vmem_limit),
    )(pair_act, pn_g, pn_b, f2d_t)
    nb = nb_flat.reshape(H, Qr, Kr)                               # metadata-only in HBM

    # ---- Kernel 2: gated attention over blocks of R MSA rows ----
    R = next(r for r in (8, 4, 2, 1) if B % r == 0)
    mask3 = msa_mask.reshape(B, 1, Q).astype(jnp.float32)
    kernel = functools.partial(_row_attention_kernel, H, key_dim, value_dim)

    def resident(shape):
        n = len(shape)
        return pl.BlockSpec(shape, lambda b, _n=n: (0,) * _n)

    # NOTE: the grid-invariant residents (nb, qkvg, ow, ...) are DMA'd once
    # (block index never changes) but still double-buffered by default; at
    # production N_res on v7x, single-buffer them (pl.Buffered(1) / manual DMA
    # into scratch) and/or reduce R to stay under the 64 MiB VMEM budget.
    out = pl.pallas_call(
        kernel,
        out_shape=jax.ShapeDtypeStruct((B, Q, C), jnp.float32),
        grid=(B // R,),
        in_specs=[
            pl.BlockSpec((R, Q, C), lambda b: (b, 0, 0)),         # msa rows (streamed)
            pl.BlockSpec((R, 1, Q), lambda b: (b, 0, 0)),         # mask rows (streamed)
            resident((H, Qr, Kr)),                                # pair bias (bf16, grid-invariant)
            resident((1, C)), resident((1, C)),                   # query_norm scale/offset
            resident((C, 2 * CK + 2 * CV)),                       # fused q|k|v|gate weights (bf16)
            resident((1, CV)),                                    # gating bias
            resident((CV, C)),                                    # output weights (bf16)
            resident((1, C)),                                     # output bias
        ],
        out_specs=pl.BlockSpec((R, Q, C), lambda b: (b, 0, 0)),
        compiler_params=pltpu.CompilerParams(
            dimension_semantics=("parallel",),
            vmem_limit_bytes=vmem_limit),
    )(msa_act, mask3, nb, qn_g, qn_b, qkvg, gb, ow, ob)
    return out


# --------------------------------------------------------------------------
# Pure-JAX reference (mirrors the PyTorch forward exactly) for verification
# --------------------------------------------------------------------------
def _reference(msa_act, msa_mask, pair_act, params, num_head):
    def ln(x, g, b):
        mu = jnp.mean(x, -1, keepdims=True)
        var = jnp.mean((x - mu) ** 2, -1, keepdims=True)
        return (x - mu) / jnp.sqrt(var + LN_EPS) * g + b

    C = msa_act.shape[-1]
    kd = C // num_head
    bias = (1e9 * (msa_mask - 1.0))[:, None, None, :]
    x = ln(msa_act, params['query_norm_w'], params['query_norm_b'])
    p = ln(pair_act, params['feat_2d_norm_w'], params['feat_2d_norm_b'])
    nb = jnp.einsum('qkc,ch->hqk', p, params['feat_2d_weights'])
    q = jnp.einsum('bqa,ahc->bqhc', x, params['q_w']) * kd ** (-0.5)
    k = jnp.einsum('bka,ahc->bkhc', x, params['k_w'])
    v = jnp.einsum('bka,ahc->bkhc', x, params['v_w'])
    logits = jnp.einsum('bqhc,bkhc->bhqk', q, k) + bias + nb[None]
    w = jax.nn.softmax(logits, axis=-1)
    wa = jnp.einsum('bhqk,bkhc->bqhc', w, v)
    gate = jax.nn.sigmoid(
        jnp.einsum('bqc,chv->bqhv', x, params['gating_w']) + params['gating_b'])
    wa = wa * gate
    return jnp.einsum('bqhc,hco->bqo', wa, params['o_w']) + params['o_b']


if __name__ == "__main__":
    B, Q, C, Cp, H = 4, 16, 32, 16, 4      # N_seq, N_res, msa_dim, pair_dim, num_head
    kd = vd = C // H

    key = jax.random.PRNGKey(0)
    keys = jax.random.split(key, 16)
    msa_act = jax.random.normal(keys[0], (B, Q, C), jnp.float32)
    msa_mask = (jax.random.uniform(keys[1], (B, Q)) > 0.2).astype(jnp.float32)
    pair_act = jax.random.normal(keys[2], (Q, Q, Cp), jnp.float32)

    # Deterministic synthetic parameters (module __init__ shapes; zero-init would
    # be degenerate, so small random values for a meaningful numerical check).
    s = 0.1
    params = dict(
        query_norm_w=jnp.ones((C,), jnp.float32) + s * jax.random.normal(keys[3], (C,)),
        query_norm_b=s * jax.random.normal(keys[4], (C,)),
        feat_2d_norm_w=jnp.ones((Cp,), jnp.float32) + s * jax.random.normal(keys[5], (Cp,)),
        feat_2d_norm_b=s * jax.random.normal(keys[6], (Cp,)),
        feat_2d_weights=jax.random.normal(keys[7], (Cp, H), jnp.float32),
        q_w=s * jax.random.normal(keys[8], (C, H, kd), jnp.float32),
        k_w=s * jax.random.normal(keys[9], (C, H, kd), jnp.float32),
        v_w=s * jax.random.normal(keys[10], (C, H, vd), jnp.float32),
        o_w=s * jax.random.normal(keys[11], (H, vd, C), jnp.float32),
        o_b=s * jax.random.normal(keys[12], (C,), jnp.float32),
        gating_w=s * jax.random.normal(keys[13], (C, H, vd), jnp.float32),
        gating_b=jnp.ones((H, vd), jnp.float32),
    )

    out = msa_row_attention_with_pair_bias(msa_act, msa_mask, pair_act, params, H)
    out = jax.block_until_ready(out)

    ref = _reference(msa_act, msa_mask, pair_act, params, H)
    assert out.shape == (B, Q, C)
    max_err = float(jnp.max(jnp.abs(out - ref)))
    # Tolerance accounts for bf16 MXU operands, bf16-stored pair bias and the
    # EUP approximate-reciprocal softmax normalization (f32 accumulation kept
    # for LN stats, mask bias, logits and softmax).
    assert jnp.allclose(out, ref, atol=3e-2, rtol=3e-2), f"max abs err {max_err}"
    print("KERNEL_OK")
</pallas_src>

<mosaic_0001>
module attributes {stable_mosaic.version = 11 : i64} {
  func.func @_pair_bias_kernel(%arg0: i32, %arg1: memref<16x16x16xf32, #tpu.memory_space<vmem>>, %arg2: memref<1x16xf32, #tpu.memory_space<vmem>>, %arg3: memref<1x16xf32, #tpu.memory_space<vmem>>, %arg4: memref<4x16xbf16, #tpu.memory_space<vmem>>, %arg5: memref<4x256xbf16, #tpu.memory_space<vmem>>) attributes {dimension_semantics = [#tpu.dimension_semantics<parallel>], iteration_bounds = array<i64: 1>, scalar_prefetch = 0 : i64, scratch_operands = 0 : i64, tpu.core_type = #tpu.core_type<tc>, window_params = [{transform_indices = @transform_0, window_bounds = array<i64: 16, 16, 16>}, {pipeline_mode = #tpu.pipeline_mode<synchronous>, transform_indices = @transform_1, window_bounds = array<i64: 1, 16>}, {pipeline_mode = #tpu.pipeline_mode<synchronous>, transform_indices = @transform_2, window_bounds = array<i64: 1, 16>}, {pipeline_mode = #tpu.pipeline_mode<synchronous>, transform_indices = @transform_3, window_bounds = array<i64: 4, 16>}, {transform_indices = @transform_4, window_bounds = array<i64: 4, 256>}]} {
    %c0 = arith.constant 0 : index
    %c0_0 = arith.constant 0 : index
    %c0_1 = arith.constant 0 : index
    %0 = vector.load %arg1[%c0, %c0_0, %c0_1] : memref<16x16x16xf32, #tpu.memory_space<vmem>>, vector<16x16x16xf32>
    %1 = vector.shape_cast %0 : vector<16x16x16xf32> to vector<256x16xf32>
    %cst = arith.constant dense<0.000000e+00> : vector<256xf32>
    %2 = vector.multi_reduction <add>, %1, %cst [1] : vector<256x16xf32> to vector<256xf32>
    %3 = vector.shape_cast %2 : vector<256xf32> to vector<256x1xf32>
    %cst_2 = arith.constant 1.600000e+01 : f32
    %4 = vector.broadcast %cst_2 : f32 to vector<256x1xf32>
    %5 = arith.divf %3, %4 : vector<256x1xf32>
    %6 = arith.mulf %1, %1 : vector<256x16xf32>
    %cst_3 = arith.constant dense<0.000000e+00> : vector<256xf32>
    %7 = vector.multi_reduction <add>, %6, %cst_3 [1] : vector<256x16xf32> to vector<256xf32>
    %8 = vector.shape_cast %7 : vector<256xf32> to vector<256x1xf32>
    %cst_4 = arith.constant 1.600000e+01 : f32
    %9 = vector.broadcast %cst_4 : f32 to vector<256x1xf32>
    %10 = arith.divf %8, %9 : vector<256x1xf32>
    %11 = arith.mulf %5, %5 : vector<256x1xf32>
    %12 = arith.subf %10, %11 : vector<256x1xf32>
    %13 = vector.broadcast %5 : vector<256x1xf32> to vector<256x16xf32>
    %14 = arith.subf %1, %13 : vector<256x16xf32>
    %cst_5 = arith.constant 9.99999974E-6 : f32
    %15 = vector.broadcast %cst_5 : f32 to vector<256x1xf32>
    %16 = arith.addf %12, %15 : vector<256x1xf32>
    %17 = math.rsqrt %16 : vector<256x1xf32>
    %18 = vector.broadcast %17 : vector<256x1xf32> to vector<256x16xf32>
    %19 = arith.mulf %14, %18 : vector<256x16xf32>
    %c0_6 = arith.constant 0 : index
    %c0_7 = arith.constant 0 : index
    %20 = vector.load %arg2[%c0_6, %c0_7] : memref<1x16xf32, #tpu.memory_space<vmem>>, vector<1x16xf32>
    %21 = vector.broadcast %20 : vector<1x16xf32> to vector<256x16xf32>
    %22 = arith.mulf %19, %21 : vector<256x16xf32>
    %c0_8 = arith.constant 0 : index
    %c0_9 = arith.constant 0 : index
    %23 = vector.load %arg3[%c0_8, %c0_9] : memref<1x16xf32, #tpu.memory_space<vmem>>, vector<1x16xf32>
    %24 = vector.broadcast %23 : vector<1x16xf32> to vector<256x16xf32>
    %25 = arith.addf %22, %24 : vector<256x16xf32>
    %c0_10 = arith.constant 0 : index
    %c0_11 = arith.constant 0 : index
    %26 = vector.load %arg4[%c0_10, %c0_11] : memref<4x16xbf16, #tpu.memory_space<vmem>>, vector<4x16xbf16>
    %27 = arith.truncf %25 : vector<256x16xf32> to vector<256x16xbf16>
    %cst_12 = arith.constant dense<0.000000e+00> : vector<4x256xf32>
    %28 = tpu.matmul %26, %27, %cst_12 {dimension_numbers = #tpu.dot_dimension_numbers<[1], [1], [0], [0], [0, 0, 1, 0], [], []>} : vector<4x16xbf16>, vector<256x16xbf16>, vector<4x256xf32> -> vector<4x256xf32>
    %29 = arith.truncf %28 : vector<4x256xf32> to vector<4x256xbf16>
    %c0_13 = arith.constant 0 : index
    %c0_14 = arith.constant 0 : index
    %30 = vector.load %arg5[%c0_13, %c0_14] : memref<4x256xbf16, #tpu.memory_space<vmem>>, vector<4x256xbf16>
    tpu.vector_store %arg5[%c0_13, %c0_14], %29 {strides = array<i32>} : memref<4x256xbf16, #tpu.memory_space<vmem>>, vector<4x256xbf16>,
    return
  }
  func.func @transform_0(%arg0: i32) -> (i32, i32, i32) {
    %c0_i32 = arith.constant 0 : i32
    %c0_i32_0 = arith.constant 0 : i32
    %c0_i32_1 = arith.constant 0 : i32
    return %arg0, %c0_i32, %c0_i32_0 : i32, i32, i32
  }
  func.func @transform_1(%arg0: i32) -> (i32, i32) {
    %c0_i32 = arith.constant 0 : i32
    %c0_i32_0 = arith.constant 0 : i32
    %c0_i32_1 = arith.constant 0 : i32
    return %c0_i32, %c0_i32_0 : i32, i32
  }
  func.func @transform_2(%arg0: i32) -> (i32, i32) {
    %c0_i32 = arith.constant 0 : i32
    %c0_i32_0 = arith.constant 0 : i32
    %c0_i32_1 = arith.constant 0 : i32
    return %c0_i32, %c0_i32_0 : i32, i32
  }
  func.func @transform_3(%arg0: i32) -> (i32, i32) {
    %c0_i32 = arith.constant 0 : i32
    %c0_i32_0 = arith.constant 0 : i32
    %c0_i32_1 = arith.constant 0 : i32
    return %c0_i32, %c0_i32_0 : i32, i32
  }
  func.func @transform_4(%arg0: i32) -> (i32, i32) {
    %c0_i32 = arith.constant 0 : i32
    %c0_i32_0 = arith.constant 0 : i32
    return %c0_i32, %arg0 : i32, i32
  }
}

</mosaic_0001>

<llo_original>
// kernel: tpu_custom_call.1
$region0: #{tpu_custom_call.1}
  #allocation0 [shape = 'u32[]', space=smem, size = 0x4, offset = 0x4, fixed_abs, tag = 'smem constant byte address 0x4 - core index']
  #allocation1 [shape = 'u32[144,128]{1,0:T(1,128)}', space=vmem, size = 0x12000, scoped, tag = 'internal scratch']
  %s0 = inlined_call_operand.hbm [shape: f32[16,16,16], index: 0, kind: input, shape index: {}]
  %s1 = inlined_call_operand.hbm [shape: f32[1,16], index: 1, kind: input, shape index: {}]
  %s2 = inlined_call_operand.hbm [shape: f32[1,16], index: 2, kind: input, shape index: {}]
  %s3 = inlined_call_operand.hbm [shape: bf16[4,16], index: 3, kind: input, shape index: {}]
  %s4 = inlined_call_operand.hbm [shape: bf16[4,256], index: 4, kind: output, shape index: {}]
  %s5 = sld [smem:[#allocation0]]
  $region42: #{tpu_custom_call.1} parent=0
    _
  %s7 = ssub.s32 1, %s5
  %s8 = scalar_select 0, %s7, %s5
  $region1: #{tpu_custom_call.1} parent=0
    #allocation2 [shape = 'u8[131072]{0}', space=vmem, size = 0x20000, scoped, tag = 'input window, operand 0, single buffered']
    #allocation3 [shape = 's32[1]{0}', space=sflag, size = 0x4, scoped, tag = 'scoped memory for tpu_custom_call.1']
    #allocation4 [shape = 's32[1]{0}', space=sflag, size = 0x4, scoped, tag = 'scoped memory for tpu_custom_call.1']
    #allocation5 [shape = 'u8[512]{0}', space=vmem, size = 0x400, scoped, tag = 'input window, operand 1, single buffered']
    #allocation6 [shape = 's32[1]{0}', space=sflag, size = 0x4, scoped, tag = 'scoped memory for tpu_custom_call.1']
    #allocation7 [shape = 'u8[512]{0}', space=vmem, size = 0x400, scoped, tag = 'input window, operand 2, single buffered']
    #allocation8 [shape = 'u8[1024]{0}', space=vmem, size = 0x400, scoped, tag = 'input window, operand 3, single buffered']
    #allocation9 [shape = 's32[1]{0}', space=sflag, size = 0x4, scoped, tag = 'scoped memory for tpu_custom_call.1']
    #allocation10 [shape = 'u8[2048]{0}', space=vmem, size = 0x800, scoped, tag = 'output window, operand 0, single buffered']
    %9 = vsyncpa [#allocation3], 0
    %10 = vsyncpa [#allocation6], 0
    %11 = vsyncpa [#allocation9], 0
    %12 = vsyncpa [#allocation4], 0
    // Predicated region
    $region2: #{tpu_custom_call.1} parent=1 // pred_check
      _
    $region3: #{tpu_custom_call.1} parent=1 // pred_check_branch
      %14 = sbr.rel (0) target = $region5
    $region4: #{tpu_custom_call.1} parent=1 // pred_region
      %s16 = ssub.s32 4096, 4096
      %17 = vsyncadd [#allocation3], %s16
      %s18 = sshll.u32 [#allocation2], 4
      %s19 = int_to_ptr.vmem [resolvable:$true] %s18
      %24 = dma.hbm_to_vmem [thread:$0]  %s0, 4096, %s19, [#allocation3], 128, 128, 8
    $region5: #{tpu_custom_call.1} parent=1 // pred_fallthru
      _
    // Predicated region
    $region6: #{tpu_custom_call.1} parent=1 // pred_check
      _
    $region7: #{tpu_custom_call.1} parent=1 // pred_check_branch
      %26 = sbr.rel (0) target = $region9
    $region8: #{tpu_custom_call.1} parent=1 // pred_region
      %s28 = ssub.s32 16, 16
      %29 = vsyncadd [#allocation6], %s28
      %s31 = sshll.u32 [#allocation5], 4
      %s32 = int_to_ptr.vmem [resolvable:$true] %s31
      %34 = dma.hbm_to_vmem [thread:$0]  %s1, 16, %s32, [#allocation6]
    $region9: #{tpu_custom_call.1} parent=1 // pred_fallthru
      _
    // Predicated region
    $region10: #{tpu_custom_call.1} parent=1 // pred_check
      _
    $region11: #{tpu_custom_call.1} parent=1 // pred_check_branch
      %36 = sbr.rel (0) target = $region13
    $region12: #{tpu_custom_call.1} parent=1 // pred_region
      %s38 = ssub.s32 16, 16
      %39 = vsyncadd [#allocation6], %s38
      %s41 = sshll.u32 [#allocation7], 4
      %s42 = int_to_ptr.vmem [resolvable:$true] %s41
      %44 = dma.hbm_to_vmem [thread:$0]  %s2, 16, %s42, [#allocation6]
    $region13: #{tpu_custom_call.1} parent=1 // pred_fallthru
      _
    // Predicated region
    $region14: #{tpu_custom_call.1} parent=1 // pred_check
      _
    $region15: #{tpu_custom_call.1} parent=1 // pred_check_branch
      %46 = sbr.rel (0) target = $region17
    $region16: #{tpu_custom_call.1} parent=1 // pred_region
      %s48 = ssub.s32 32, 32
      %49 = vsyncadd [#allocation9], %s48
      %s51 = sshll.u32 [#allocation8], 4
      %s52 = int_to_ptr.vmem [resolvable:$true] %s51
      %54 = dma.hbm_to_vmem [thread:$0]  %s3, 32, %s52, [#allocation9]
    $region17: #{tpu_custom_call.1} parent=1 // pred_fallthru
      _
    // Predicated region
    $region18: #{tpu_custom_call.1} parent=1 // pred_check
      _
    $region19: #{tpu_custom_call.1} parent=1 // pred_check_branch
      %56 = sbr.rel (0) target = $region21
    $region20: #{tpu_custom_call.1} parent=1 // pred_region
      %57 = dma.done [#allocation3], 4096
    $region21: #{tpu_custom_call.1} parent=1 // pred_fallthru
      _
    // Predicated region
    $region22: #{tpu_custom_call.1} parent=1 // pred_check
      _
    $region23: #{tpu_custom_call.1} parent=1 // pred_check_branch
      %59 = sbr.rel (0) target = $region25
    $region24: #{tpu_custom_call.1} parent=1 // pred_region
      %60 = dma.done [#allocation6], 16
    $region25: #{tpu_custom_call.1} parent=1 // pred_fallthru
      _
    // Predicated region
    $region26: #{tpu_custom_call.1} parent=1 // pred_check
      _
    $region27: #{tpu_custom_call.1} parent=1 // pred_check_branch
      %62 = sbr.rel (0) target = $region29
    $region28: #{tpu_custom_call.1} parent=1 // pred_region
      %63 = dma.done [#allocation6], 16
    $region29: #{tpu_custom_call.1} parent=1 // pred_fallthru
      _
    // Predicated region
    $region30: #{tpu_custom_call.1} parent=1 // pred_check
      _
    $region31: #{tpu_custom_call.1} parent=1 // pred_check_branch
      %65 = sbr.rel (0) target = $region33
    $region32: #{tpu_custom_call.1} parent=1 // pred_region
      %66 = dma.done [#allocation9], 32
    $region33: #{tpu_custom_call.1} parent=1 // pred_fallthru
      _
    %v68 = vld [vmem:[#allocation2] sm:$0xff]
    %v69 = vld [vmem:[#allocation2 + $0x8] sm:$0xff]
    %v70 = vld [vmem:[#allocation2 + $0x10] sm:$0xff]
    %v71 = vld [vmem:[#allocation2 + $0x18] sm:$0xff]
    %v72 = vld [vmem:[#allocation2 + $0x20] sm:$0xff]
    %v73 = vld [vmem:[#allocation2 + $0x28] sm:$0xff]
    %v74 = vld [vmem:[#allocation2 + $0x30] sm:$0xff]
    %v75 = vld [vmem:[#allocation2 + $0x38] sm:$0xff]
    %v76 = vld [vmem:[#allocation2 + $0x40] sm:$0xff]
    %v77 = vld [vmem:[#allocation2 + $0x48] sm:$0xff]
    %v78 = vld [vmem:[#allocation2 + $0x50] sm:$0xff]
    %v79 = vld [vmem:[#allocation2 + $0x58] sm:$0xff]
    %v80 = vld [vmem:[#allocation2 + $0x60] sm:$0xff]
    %v81 = vld [vmem:[#allocation2 + $0x68] sm:$0xff]
    %v82 = vld [vmem:[#allocation2 + $0x70] sm:$0xff]
    %v83 = vld [vmem:[#allocation2 + $0x78] sm:$0xff]
    %v84 = vld [vmem:[#allocation2 + $0x80] sm:$0xff]
    %v85 = vld [vmem:[#allocation2 + $0x88] sm:$0xff]
    %v86 = vld [vmem:[#allocation2 + $0x90] sm:$0xff]
    %v87 = vld [vmem:[#allocation2 + $0x98] sm:$0xff]
    %v88 = vld [vmem:[#allocation2 + $0xa0] sm:$0xff]
    %v89 = vld [vmem:[#allocation2 + $0xa8] sm:$0xff]
    %v90 = vld [vmem:[#allocation2 + $0xb0] sm:$0xff]
    %v91 = vld [vmem:[#allocation2 + $0xb8] sm:$0xff]
    %v92 = vld [vmem:[#allocation2 + $0xc0] sm:$0xff]
    %v93 = vld [vmem:[#allocation2 + $0xc8] sm:$0xff]
    %v94 = vld [vmem:[#allocation2 + $0xd0] sm:$0xff]
    %v95 = vld [vmem:[#allocation2 + $0xd8] sm:$0xff]
    %v96 = vld [vmem:[#allocation2 + $0xe0] sm:$0xff]
    %v97 = vld [vmem:[#allocation2 + $0xe8] sm:$0xff]
    %v98 = vld [vmem:[#allocation2 + $0xf0] sm:$0xff]
    %v99 = vld [vmem:[#allocation2 + $0xf8] sm:$0xff]
    %vm100 = vcmask 130048
    %v101 = vsel %vm100, %v68, 0.0
    %102 = vadd.xlane.f32.xlu0 %v101
    %v103 = vpop.xlane.xlu0 %102
    %v104 = vsel %vm100, %v69, 0.0
    %105 = vadd.xlane.f32.xlu0 %v104
    %v106 = vpop.xlane.xlu0 %105
    %v107 = vsel %vm100, %v70, 0.0
    %108 = vadd.xlane.f32.xlu0 %v107
    %v109 = vpop.xlane.xlu0 %108
    %v110 = vsel %vm100, %v71, 0.0
    %111 = vadd.xlane.f32.xlu0 %v110
    %v112 = vpop.xlane.xlu0 %111
    %v113 = vsel %vm100, %v72, 0.0
    %114 = vadd.xlane.f32.xlu0 %v113
    %v115 = vpop.xlane.xlu0 %114
    %v116 = vsel %vm100, %v73, 0.0
    %117 = vadd.xlane.f32.xlu0 %v116
    %v118 = vpop.xlane.xlu0 %117
    %v119 = vsel %vm100, %v74, 0.0
    %120 = vadd.xlane.f32.xlu0 %v119
    %v121 = vpop.xlane.xlu0 %120
    %v122 = vsel %vm100, %v75, 0.0
    %123 = vadd.xlane.f32.xlu0 %v122
    %v124 = vpop.xlane.xlu0 %123
    %v125 = vsel %vm100, %v76, 0.0
    %126 = vadd.xlane.f32.xlu0 %v125
    %v127 = vpop.xlane.xlu0 %126
    %v128 = vsel %vm100, %v77, 0.0
    %129 = vadd.xlane.f32.xlu0 %v128
    %v130 = vpop.xlane.xlu0 %129
    %v131 = vsel %vm100, %v78, 0.0
    %132 = vadd.xlane.f32.xlu0 %v131
    %v133 = vpop.xlane.xlu0 %132
    %v134 = vsel %vm100, %v79, 0.0
    %135 = vadd.xlane.f32.xlu0 %v134
    %v136 = vpop.xlane.xlu0 %135
    %v137 = vsel %vm100, %v80, 0.0
    %138 = vadd.xlane.f32.xlu0 %v137
    %v139 = vpop.xlane.xlu0 %138
    %v140 = vsel %vm100, %v81, 0.0
    %141 = vadd.xlane.f32.xlu0 %v140
    %v142 = vpop.xlane.xlu0 %141
    %v143 = vsel %vm100, %v82, 0.0
    %144 = vadd.xlane.f32.xlu0 %v143
    %v145 = vpop.xlane.xlu0 %144
    %v146 = vsel %vm100, %v83, 0.0
    %147 = vadd.xlane.f32.xlu0 %v146
    %v148 = vpop.xlane.xlu0 %147
    %v149 = vsel %vm100, %v84, 0.0
    %150 = vadd.xlane.f32.xlu0 %v149
    %v151 = vpop.xlane.xlu0 %150
    %v152 = vsel %vm100, %v85, 0.0
    %153 = vadd.xlane.f32.xlu0 %v152
    %v154 = vpop.xlane.xlu0 %153
    %v155 = vsel %vm100, %v86, 0.0
    %156 = vadd.xlane.f32.xlu0 %v155
    %v157 = vpop.xlane.xlu0 %156
    %v158 = vsel %vm100, %v87, 0.0
    %159 = vadd.xlane.f32.xlu0 %v158
    %v160 = vpop.xlane.xlu0 %159
    %v161 = vsel %vm100, %v88, 0.0
    %162 = vadd.xlane.f32.xlu0 %v161
    %v163 = vpop.xlane.xlu0 %162
    %v164 = vsel %vm100, %v89, 0.0
    %165 = vadd.xlane.f32.xlu0 %v164
    %v166 = vpop.xlane.xlu0 %165
    %v167 = vsel %vm100, %v90, 0.0
    %168 = vadd.xlane.f32.xlu0 %v167
    %v169 = vpop.xlane.xlu0 %168
    %v170 = vsel %vm100, %v91, 0.0
    %171 = vadd.xlane.f32.xlu0 %v170
    %v172 = vpop.xlane.xlu0 %171
    %v173 = vsel %vm100, %v92, 0.0
    %174 = vadd.xlane.f32.xlu0 %v173
    %v175 = vpop.xlane.xlu0 %174
    %v176 = vsel %vm100, %v93, 0.0
    %177 = vadd.xlane.f32.xlu0 %v176
    %v178 = vpop.xlane.xlu0 %177
    %v179 = vsel %vm100, %v94, 0.0
    %180 = vadd.xlane.f32.xlu0 %v179
    %v181 = vpop.xlane.xlu0 %180
    %v182 = vsel %vm100, %v95, 0.0
    %183 = vadd.xlane.f32.xlu0 %v182
    %v184 = vpop.xlane.xlu0 %183
    %v185 = vsel %vm100, %v96, 0.0
    %186 = vadd.xlane.f32.xlu0 %v185
    %v187 = vpop.xlane.xlu0 %186
    %v188 = vsel %vm100, %v97, 0.0
    %189 = vadd.xlane.f32.xlu0 %v188
    %v190 = vpop.xlane.xlu0 %189
    %v191 = vsel %vm100, %v98, 0.0
    %192 = vadd.xlane.f32.xlu0 %v191
    %v193 = vpop.xlane.xlu0 %192
    %v194 = vsel %vm100, %v99, 0.0
    %195 = vadd.xlane.f32.xlu0 %v194
    %v196 = vpop.xlane.xlu0 %195
    %v197 = vrcp.pop 16.0
    %v198 = vmul.f32 %v103, %v197
    %v199 = vmul.f32 %v106, %v197
    %v200 = vmul.f32 %v109, %v197
    %v201 = vmul.f32 %v112, %v197
    %v202 = vmul.f32 %v115, %v197
    %v203 = vmul.f32 %v118, %v197
    %v204 = vmul.f32 %v121, %v197
    %v205 = vmul.f32 %v124, %v197
    %v206 = vmul.f32 %v127, %v197
    %v207 = vmul.f32 %v130, %v197
    %v208 = vmul.f32 %v133, %v197
    %v209 = vmul.f32 %v136, %v197
    %v210 = vmul.f32 %v139, %v197
    %v211 = vmul.f32 %v142, %v197
    %v212 = vmul.f32 %v145, %v197
    %v213 = vmul.f32 %v148, %v197
    %v214 = vmul.f32 %v151, %v197
    %v215 = vmul.f32 %v154, %v197
    %v216 = vmul.f32 %v157, %v197
    %v217 = vmul.f32 %v160, %v197
    %v218 = vmul.f32 %v163, %v197
    %v219 = vmul.f32 %v166, %v197
    %v220 = vmul.f32 %v169, %v197
    %v221 = vmul.f32 %v172, %v197
    %v222 = vmul.f32 %v175, %v197
    %v223 = vmul.f32 %v178, %v197
    %v224 = vmul.f32 %v181, %v197
    %v225 = vmul.f32 %v184, %v197
    %v226 = vmul.f32 %v187, %v197
    %v227 = vmul.f32 %v190, %v197
    %v228 = vmul.f32 %v193, %v197
    %v229 = vmul.f32 %v196, %v197
    %v230 = vmul.f32 %v68, %v68
    %v231 = vmul.f32 %v69, %v69
    %v232 = vmul.f32 %v70, %v70
    %v233 = vmul.f32 %v71, %v71
    %v234 = vmul.f32 %v72, %v72
    %v235 = vmul.f32 %v73, %v73
    %v236 = vmul.f32 %v74, %v74
    %v237 = vmul.f32 %v75, %v75
    %v238 = vmul.f32 %v76, %v76
    %v239 = vmul.f32 %v77, %v77
    %v240 = vmul.f32 %v78, %v78
    %v241 = vmul.f32 %v79, %v79
    %v242 = vmul.f32 %v80, %v80
    %v243 = vmul.f32 %v81, %v81
    %v244 = vmul.f32 %v82, %v82
    %v245 = vmul.f32 %v83, %v83
    %v246 = vmul.f32 %v84, %v84
    %v247 = vmul.f32 %v85, %v85
    %v248 = vmul.f32 %v86, %v86
    %v249 = vmul.f32 %v87, %v87
    %v250 = vmul.f32 %v88, %v88
    %v251 = vmul.f32 %v89, %v89
    %v252 = vmul.f32 %v90, %v90
    %v253 = vmul.f32 %v91, %v91
    %v254 = vmul.f32 %v92, %v92
    %v255 = vmul.f32 %v93, %v93
    %v256 = vmul.f32 %v94, %v94
    %v257 = vmul.f32 %v95, %v95
    %v258 = vmul.f32 %v96, %v96
    %v259 = vmul.f32 %v97, %v97
    %v260 = vmul.f32 %v98, %v98
    %v261 = vmul.f32 %v99, %v99
    %v262 = vsel %vm100, %v230, 0.0
    %263 = vadd.xlane.f32.xlu0 %v262
    %v264 = vpop.xlane.xlu0 %263
    %v265 = vsel %vm100, %v231, 0.0
    %266 = vadd.xlane.f32.xlu0 %v265
    %v267 = vpop.xlane.xlu0 %266
    %v268 = vsel %vm100, %v232, 0.0
    %269 = vadd.xlane.f32.xlu0 %v268
    %v270 = vpop.xlane.xlu0 %269
    %v271 = vsel %vm100, %v233, 0.0
    %272 = vadd.xlane.f32.xlu0 %v271
    %v273 = vpop.xlane.xlu0 %272
    %v274 = vsel %vm100, %v234, 0.0
    %275 = vadd.xlane.f32.xlu0 %v274
    %v276 = vpop.xlane.xlu0 %275
    %v277 = vsel %vm100, %v235, 0.0
    %278 = vadd.xlane.f32.xlu0 %v277
    %v279 = vpop.xlane.xlu0 %278
    %v280 = vsel %vm100, %v236, 0.0
    %281 = vadd.xlane.f32.xlu0 %v280
    %v282 = vpop.xlane.xlu0 %281
    %v283 = vsel %vm100, %v237, 0.0
    %284 = vadd.xlane.f32.xlu0 %v283
    %v285 = vpop.xlane.xlu0 %284
    %v286 = vsel %vm100, %v238, 0.0
    %287 = vadd.xlane.f32.xlu0 %v286
    %v288 = vpop.xlane.xlu0 %287
    %v289 = vsel %vm100, %v239, 0.0
    %290 = vadd.xlane.f32.xlu0 %v289
    %v291 = vpop.xlane.xlu0 %290
    %v292 = vsel %vm100, %v240, 0.0
    %293 = vadd.xlane.f32.xlu0 %v292
    %v294 = vpop.xlane.xlu0 %293
    %v295 = vsel %vm100, %v241, 0.0
    %296 = vadd.xlane.f32.xlu0 %v295
    %v297 = vpop.xlane.xlu0 %296
    %v298 = vsel %vm100, %v242, 0.0
    %299 = vadd.xlane.f32.xlu0 %v298
    %v300 = vpop.xlane.xlu0 %299
    %v301 = vsel %vm100, %v243, 0.0
    %302 = vadd.xlane.f32.xlu0 %v301
    %v303 = vpop.xlane.xlu0 %302
    %v304 = vsel %vm100, %v244, 0.0
    %305 = vadd.xlane.f32.xlu0 %v304
    %v306 = vpop.xlane.xlu0 %305
    %v307 = vsel %vm100, %v245, 0.0
    %308 = vadd.xlane.f32.xlu0 %v307
    %v309 = vpop.xlane.xlu0 %308
    %v310 = vsel %vm100, %v246, 0.0
    %311 = vadd.xlane.f32.xlu0 %v310
    %v312 = vpop.xlane.xlu0 %311
    %v313 = vsel %vm100, %v247, 0.0
    %314 = vadd.xlane.f32.xlu0 %v313
    %v315 = vpop.xlane.xlu0 %314
    %v316 = vsel %vm100, %v248, 0.0
    %317 = vadd.xlane.f32.xlu0 %v316
    %v318 = vpop.xlane.xlu0 %317
    %v319 = vsel %vm100, %v249, 0.0
    %320 = vadd.xlane.f32.xlu0 %v319
    %v321 = vpop.xlane.xlu0 %320
    %v322 = vsel %vm100, %v250, 0.0
    %323 = vadd.xlane.f32.xlu0 %v322
    %v324 = vpop.xlane.xlu0 %323
    %v325 = vsel %vm100, %v251, 0.0
    %326 = vadd.xlane.f32.xlu0 %v325
    %v327 = vpop.xlane.xlu0 %326
    %v328 = vsel %vm100, %v252, 0.0
    %329 = vadd.xlane.f32.xlu0 %v328
    %v330 = vpop.xlane.xlu0 %329
    %v331 = vsel %vm100, %v253, 0.0
    %332 = vadd.xlane.f32.xlu0 %v331
    %v333 = vpop.xlane.xlu0 %332
    %v334 = vsel %vm100, %v254, 0.0
    %335 = vadd.xlane.f32.xlu0 %v334
    %v336 = vpop.xlane.xlu0 %335
    %v337 = vsel %vm100, %v255, 0.0
    %338 = vadd.xlane.f32.xlu0 %v337
    %v339 = vpop.xlane.xlu0 %338
    %v340 = vsel %vm100, %v256, 0.0
    %341 = vadd.xlane.f32.xlu0 %v340
    %v342 = vpop.xlane.xlu0 %341
    %v343 = vsel %vm100, %v257, 0.0
    %344 = vadd.xlane.f32.xlu0 %v343
    %v345 = vpop.xlane.xlu0 %344
    %v346 = vsel %vm100, %v258, 0.0
    %347 = vadd.xlane.f32.xlu0 %v346
    %v348 = vpop.xlane.xlu0 %347
    %v349 = vsel %vm100, %v259, 0.0
    %350 = vadd.xlane.f32.xlu0 %v349
    %v351 = vpop.xlane.xlu0 %350
    %v352 = vsel %vm100, %v260, 0.0
    %353 = vadd.xlane.f32.xlu0 %v352
    %v354 = vpop.xlane.xlu0 %353
    %v355 = vsel %vm100, %v261, 0.0
    %356 = vadd.xlane.f32.xlu0 %v355
    %v357 = vpop.xlane.xlu0 %356
    %v358 = vmul.f32 %v264, %v197
    %v359 = vmul.f32 %v267, %v197
    %v360 = vmul.f32 %v270, %v197
    %v361 = vmul.f32 %v273, %v197
    %v362 = vmul.f32 %v276, %v197
    %v363 = vmul.f32 %v279, %v197
    %v364 = vmul.f32 %v282, %v197
    %v365 = vmul.f32 %v285, %v197
    %v366 = vmul.f32 %v288, %v197
    %v367 = vmul.f32 %v291, %v197
    %v368 = vmul.f32 %v294, %v197
    %v369 = vmul.f32 %v297, %v197
    %v370 = vmul.f32 %v300, %v197
    %v371 = vmul.f32 %v303, %v197
    %v372 = vmul.f32 %v306, %v197
    %v373 = vmul.f32 %v309, %v197
    %v374 = vmul.f32 %v312, %v197
    %v375 = vmul.f32 %v315, %v197
    %v376 = vmul.f32 %v318, %v197
    %v377 = vmul.f32 %v321, %v197
    %v378 = vmul.f32 %v324, %v197
    %v379 = vmul.f32 %v327, %v197
    %v380 = vmul.f32 %v330, %v197
    %v381 = vmul.f32 %v333, %v197
    %v382 = vmul.f32 %v336, %v197
    %v383 = vmul.f32 %v339, %v197
    %v384 = vmul.f32 %v342, %v197
    %v385 = vmul.f32 %v345, %v197
    %v386 = vmul.f32 %v348, %v197
    %v387 = vmul.f32 %v351, %v197
    %v388 = vmul.f32 %v354, %v197
    %v389 = vmul.f32 %v357, %v197
    %v390 = vmul.f32 %v198, %v198
    %v391 = vmul.f32 %v199, %v199
    %v392 = vmul.f32 %v200, %v200
    %v393 = vmul.f32 %v201, %v201
    %v394 = vmul.f32 %v202, %v202
    %v395 = vmul.f32 %v203, %v203
    %v396 = vmul.f32 %v204, %v204
    %v397 = vmul.f32 %v205, %v205
    %v398 = vmul.f32 %v206, %v206
    %v399 = vmul.f32 %v207, %v207
    %v400 = vmul.f32 %v208, %v208
    %v401 = vmul.f32 %v209, %v209
    %v402 = vmul.f32 %v210, %v210
    %v403 = vmul.f32 %v211, %v211
    %v404 = vmul.f32 %v212, %v212
    %v405 = vmul.f32 %v213, %v213
    %v406 = vmul.f32 %v214, %v214
    %v407 = vmul.f32 %v215, %v215
    %v408 = vmul.f32 %v216, %v216
    %v409 = vmul.f32 %v217, %v217
    %v410 = vmul.f32 %v218, %v218
    %v411 = vmul.f32 %v219, %v219
    %v412 = vmul.f32 %v220, %v220
    %v413 = vmul.f32 %v221, %v221
    %v414 = vmul.f32 %v222, %v222
    %v415 = vmul.f32 %v223, %v223
    %v416 = vmul.f32 %v224, %v224
    %v417 = vmul.f32 %v225, %v225
    %v418 = vmul.f32 %v226, %v226
    %v419 = vmul.f32 %v227, %v227
    %v420 = vmul.f32 %v228, %v228
    %v421 = vmul.f32 %v229, %v229
    %v422 = vsub.f32 %v358, %v390
    %v423 = vsub.f32 %v359, %v391
    %v424 = vsub.f32 %v360, %v392
    %v425 = vsub.f32 %v361, %v393
    %v426 = vsub.f32 %v362, %v394
    %v427 = vsub.f32 %v363, %v395
    %v428 = vsub.f32 %v364, %v396
    %v429 = vsub.f32 %v365, %v397
    %v430 = vsub.f32 %v366, %v398
    %v431 = vsub.f32 %v367, %v399
    %v432 = vsub.f32 %v368, %v400
    %v433 = vsub.f32 %v369, %v401
    %v434 = vsub.f32 %v370, %v402
    %v435 = vsub.f32 %v371, %v403
    %v436 = vsub.f32 %v372, %v404
    %v437 = vsub.f32 %v373, %v405
    %v438 = vsub.f32 %v374, %v406
    %v439 = vsub.f32 %v375, %v407
    %v440 = vsub.f32 %v376, %v408
    %v441 = vsub.f32 %v377, %v409
    %v442 = vsub.f32 %v378, %v410
    %v443 = vsub.f32 %v379, %v411
    %v444 = vsub.f32 %v380, %v412
    %v445 = vsub.f32 %v381, %v413
    %v446 = vsub.f32 %v382, %v414
    %v447 = vsub.f32 %v383, %v415
    %v448 = vsub.f32 %v384, %v416
    %v449 = vsub.f32 %v385, %v417
    %v450 = vsub.f32 %v386, %v418
    %v451 = vsub.f32 %v387, %v419
    %v452 = vsub.f32 %v388, %v420
    %v453 = vsub.f32 %v389, %v421
    %v454 = vsub.f32 %v68, %v198
    %v455 = vsub.f32 %v69, %v199
    %v456 = vsub.f32 %v70, %v200
    %v457 = vsub.f32 %v71, %v201
    %v458 = vsub.f32 %v72, %v202
    %v459 = vsub.f32 %v73, %v203
    %v460 = vsub.f32 %v74, %v204
    %v461 = vsub.f32 %v75, %v205
    %v462 = vsub.f32 %v76, %v206
    %v463 = vsub.f32 %v77, %v207
    %v464 = vsub.f32 %v78, %v208
    %v465 = vsub.f32 %v79, %v209
    %v466 = vsub.f32 %v80, %v210
    %v467 = vsub.f32 %v81, %v211
    %v468 = vsub.f32 %v82, %v212
    %v469 = vsub.f32 %v83, %v213
    %v470 = vsub.f32 %v84, %v214
    %v471 = vsub.f32 %v85, %v215
    %v472 = vsub.f32 %v86, %v216
    %v473 = vsub.f32 %v87, %v217
    %v474 = vsub.f32 %v88, %v218
    %v475 = vsub.f32 %v89, %v219
    %v476 = vsub.f32 %v90, %v220
    %v477 = vsub.f32 %v91, %v221
    %v478 = vsub.f32 %v92, %v222
    %v479 = vsub.f32 %v93, %v223
    %v480 = vsub.f32 %v94, %v224
    %v481 = vsub.f32 %v95, %v225
    %v482 = vsub.f32 %v96, %v226
    %v483 = vsub.f32 %v97, %v227
    %v484 = vsub.f32 %v98, %v228
    %v485 = vsub.f32 %v99, %v229
    %v486 = vadd.f32 %v422, 1e-05
    %v487 = vadd.f32 %v423, 1e-05
    %v488 = vadd.f32 %v424, 1e-05
    %v489 = vadd.f32 %v425, 1e-05
    %v490 = vadd.f32 %v426, 1e-05
    %v491 = vadd.f32 %v427, 1e-05
    %v492 = vadd.f32 %v428, 1e-05
    %v493 = vadd.f32 %v429, 1e-05
    %v494 = vadd.f32 %v430, 1e-05
    %v495 = vadd.f32 %v431, 1e-05
    %v496 = vadd.f32 %v432, 1e-05
    %v497 = vadd.f32 %v433, 1e-05
    %v498 = vadd.f32 %v434, 1e-05
    %v499 = vadd.f32 %v435, 1e-05
    %v500 = vadd.f32 %v436, 1e-05
    %v501 = vadd.f32 %v437, 1e-05
    %v502 = vadd.f32 %v438, 1e-05
    %v503 = vadd.f32 %v439, 1e-05
    %v504 = vadd.f32 %v440, 1e-05
    %v505 = vadd.f32 %v441, 1e-05
    %v506 = vadd.f32 %v442, 1e-05
    %v507 = vadd.f32 %v443, 1e-05
    %v508 = vadd.f32 %v444, 1e-05
    %v509 = vadd.f32 %v445, 1e-05
    %v510 = vadd.f32 %v446, 1e-05
    %v511 = vadd.f32 %v447, 1e-05
    %v512 = vadd.f32 %v448, 1e-05
    %v513 = vadd.f32 %v449, 1e-05
    %v514 = vadd.f32 %v450, 1e-05
    %v515 = vadd.f32 %v451, 1e-05
    %v516 = vadd.f32 %v452, 1e-05
    %v517 = vadd.f32 %v453, 1e-05
    %v518 = vrsqrt.pop %v486
    %v519 = vrsqrt.pop %v487
    %v520 = vrsqrt.pop %v488
    %v521 = vrsqrt.pop %v489
    %v522 = vrsqrt.pop %v490
    %v523 = vrsqrt.pop %v491
    %v524 = vrsqrt.pop %v492
    %v525 = vrsqrt.pop %v493
    %v526 = vrsqrt.pop %v494
    %v527 = vrsqrt.pop %v495
    %v528 = vrsqrt.pop %v496
    %v529 = vrsqrt.pop %v497
    %v530 = vrsqrt.pop %v498
    %v531 = vrsqrt.pop %v499
    %v532 = vrsqrt.pop %v500
    %v533 = vrsqrt.pop %v501
    %v534 = vrsqrt.pop %v502
    %v535 = vrsqrt.pop %v503
    %v536 = vrsqrt.pop %v504
    %v537 = vrsqrt.pop %v505
    %v538 = vrsqrt.pop %v506
    %v539 = vrsqrt.pop %v507
    %v540 = vrsqrt.pop %v508
    %v541 = vrsqrt.pop %v509
    %v542 = vrsqrt.pop %v510
    %v543 = vrsqrt.pop %v511
    %v544 = vrsqrt.pop %v512
    %v545 = vrsqrt.pop %v513
    %v546 = vrsqrt.pop %v514
    %v547 = vrsqrt.pop %v515
    %v548 = vrsqrt.pop %v516
    %v549 = vrsqrt.pop %v517
    %v550 = vmul.f32 %v454, %v518
    %v551 = vmul.f32 %v455, %v519
    %v552 = vmul.f32 %v456, %v520
    %v553 = vmul.f32 %v457, %v521
    %v554 = vmul.f32 %v458, %v522
    %v555 = vmul.f32 %v459, %v523
    %v556 = vmul.f32 %v460, %v524
    %v557 = vmul.f32 %v461, %v525
    %v558 = vmul.f32 %v462, %v526
    %v559 = vmul.f32 %v463, %v527
    %v560 = vmul.f32 %v464, %v528
    %v561 = vmul.f32 %v465, %v529
    %v562 = vmul.f32 %v466, %v530
    %v563 = vmul.f32 %v467, %v531
    %v564 = vmul.f32 %v468, %v532
    %v565 = vmul.f32 %v469, %v533
    %v566 = vmul.f32 %v470, %v534
    %v567 = vmul.f32 %v471, %v535
    %v568 = vmul.f32 %v472, %v536
    %v569 = vmul.f32 %v473, %v537
    %v570 = vmul.f32 %v474, %v538
    %v571 = vmul.f32 %v475, %v539
    %v572 = vmul.f32 %v476, %v540
    %v573 = vmul.f32 %v477, %v541
    %v574 = vmul.f32 %v478, %v542
    %v575 = vmul.f32 %v479, %v543
    %v576 = vmul.f32 %v480, %v544
    %v577 = vmul.f32 %v481, %v545
    %v578 = vmul.f32 %v482, %v546
    %v579 = vmul.f32 %v483, %v547
    %v580 = vmul.f32 %v484, %v548
    %v581 = vmul.f32 %v485, %v549
    %v582 = vld [vmem:[#allocation5] sm:$0x1]
    %v584 = vlaneseq
    %v585 = vshrl.u32 %v584, 7
    %v586 = vsub.s32 0, %v585
    %v587 = vrot.slane %v582, %v586
    %v589 = vmul.f32 %v550, %v587
    %v590 = vmul.f32 %v551, %v587
    %v591 = vmul.f32 %v552, %v587
    %v592 = vmul.f32 %v553, %v587
    %v593 = vmul.f32 %v554, %v587
    %v594 = vmul.f32 %v555, %v587
    %v595 = vmul.f32 %v556, %v587
    %v596 = vmul.f32 %v557, %v587
    %v597 = vmul.f32 %v558, %v587
    %v598 = vmul.f32 %v559, %v587
    %v599 = vmul.f32 %v560, %v587
    %v600 = vmul.f32 %v561, %v587
    %v601 = vmul.f32 %v562, %v587
    %v602 = vmul.f32 %v563, %v587
    %v603 = vmul.f32 %v564, %v587
    %v604 = vmul.f32 %v565, %v587
    %v605 = vmul.f32 %v566, %v587
    %v606 = vmul.f32 %v567, %v587
    %v607 = vmul.f32 %v568, %v587
    %v608 = vmul.f32 %v569, %v587
    %v609 = vmul.f32 %v570, %v587
    %v610 = vmul.f32 %v571, %v587
    %v611 = vmul.f32 %v572, %v587
    %v612 = vmul.f32 %v573, %v587
    %v613 = vmul.f32 %v574, %v587
    %v614 = vmul.f32 %v575, %v587
    %v615 = vmul.f32 %v576, %v587
    %v616 = vmul.f32 %v577, %v587
    %v617 = vmul.f32 %v578, %v587
    %v618 = vmul.f32 %v579, %v587
    %v619 = vmul.f32 %v580, %v587
    %v620 = vmul.f32 %v581, %v587
    %v621 = vld [vmem:[#allocation7] sm:$0x1]
    %v623 = vlaneseq
    %v624 = vshrl.u32 %v623, 7
    %v625 = vsub.s32 0, %v624
    %v626 = vrot.slane %v621, %v625
    %v628 = vadd.f32 %v589, %v626
    %v629 = vadd.f32 %v590, %v626
    %v630 = vadd.f32 %v591, %v626
    %v631 = vadd.f32 %v592, %v626
    %v632 = vadd.f32 %v593, %v626
    %v633 = vadd.f32 %v594, %v626
    %v634 = vadd.f32 %v595, %v626
    %v635 = vadd.f32 %v596, %v626
    %v636 = vadd.f32 %v597, %v626
    %v637 = vadd.f32 %v598, %v626
    %v638 = vadd.f32 %v599, %v626
    %v639 = vadd.f32 %v600, %v626
    %v640 = vadd.f32 %v601, %v626
    %v641 = vadd.f32 %v602, %v626
    %v642 = vadd.f32 %v603, %v626
    %v643 = vadd.f32 %v604, %v626
    %v644 = vadd.f32 %v605, %v626
    %v645 = vadd.f32 %v606, %v626
    %v646 = vadd.f32 %v607, %v626
    %v647 = vadd.f32 %v608, %v626
    %v648 = vadd.f32 %v609, %v626
    %v649 = vadd.f32 %v610, %v626
    %v650 = vadd.f32 %v611, %v626
    %v651 = vadd.f32 %v612, %v626
    %v652 = vadd.f32 %v613, %v626
    %v653 = vadd.f32 %v614, %v626
    %v654 = vadd.f32 %v615, %v626
    %v655 = vadd.f32 %v616, %v626
    %v656 = vadd.f32 %v617, %v626
    %v657 = vadd.f32 %v618, %v626
    %v658 = vadd.f32 %v619, %v626
    %v659 = vadd.f32 %v620, %v626
    %v660 = vld [vmem:[#allocation8] sm:$0x3]
    %v661 = vpack.c.bf16 %v629, %v628
    %v662 = vpack.c.bf16 %v631, %v630
    %v663 = vpack.c.bf16 %v633, %v632
    %v664 = vpack.c.bf16 %v635, %v634
    %v665 = vpack.c.bf16 %v637, %v636
    %v666 = vpack.c.bf16 %v639, %v638
    %v667 = vpack.c.bf16 %v641, %v640
    %v668 = vpack.c.bf16 %v643, %v642
    %v669 = vpack.c.bf16 %v645, %v644
    %v670 = vpack.c.bf16 %v647, %v646
    %v671 = vpack.c.bf16 %v649, %v648
    %v672 = vpack.c.bf16 %v651, %v650
    %v673 = vpack.c.bf16 %v653, %v652
    %v674 = vpack.c.bf16 %v655, %v654
    %v675 = vpack.c.bf16 %v657, %v656
    %v676 = vpack.c.bf16 %v659, %v658
    %v678 = vsel %vm100, %v660, 0
    %v681 = vsel %vm100, %v661, 0
    %v684 = vsel %vm100, %v662, 0
    %v687 = vsel %vm100, %v663, 0
    %v690 = vsel %vm100, %v664, 0
    %v693 = vsel %vm100, %v665, 0
    %v696 = vsel %vm100, %v666, 0
    %v699 = vsel %vm100, %v667, 0
    %v702 = vsel %vm100, %v668, 0
    %v705 = vsel %vm100, %v669, 0
    %v708 = vsel %vm100, %v670, 0
    %v711 = vsel %vm100, %v671, 0
    %v714 = vsel %vm100, %v672, 0
    %v717 = vsel %vm100, %v673, 0
    %v720 = vsel %vm100, %v674, 0
    %v723 = vsel %vm100, %v675, 0
    %v726 = vsel %vm100, %v676, 0
    %728 = vmatprep.subr.bf16.mxu0 0
    %729 = vmatpush1.bf16.xpose.msra.mxu0 %v681
    %730 = vmatprep.subr.bf16.mxu0 0
    %731 = vmatpush1.bf16.xpose.msra.mxu0 %v684
    %732 = vmatprep.subr.bf16.mxu0 0
    %733 = vmatpush1.bf16.xpose.msra.mxu0 %v687
    %734 = vmatprep.subr.bf16.mxu0 0
    %735 = vmatpush1.bf16.xpose.msra.mxu0 %v690
    %736 = vmatprep.subr.bf16.mxu0 0
    %737 = vmatpush1.bf16.xpose.msra.mxu0 %v693
    %738 = vmatprep.subr.bf16.mxu0 0
    %739 = vmatpush1.bf16.xpose.msra.mxu0 %v696
    %740 = vmatprep.subr.bf16.mxu0 0
    %741 = vmatpush1.bf16.xpose.msra.mxu0 %v699
    %742 = vmatprep.subr.bf16.mxu0 0
    %743 = vmatpush1.bf16.xpose.msra.mxu0 %v702
    %744 = vmatprep.subr.bf16.mxu0 0
    %745 = vmatpush1.bf16.xpose.msra.mxu0 %v705
    %746 = vmatprep.subr.bf16.mxu0 0
    %747 = vmatpush1.bf16.xpose.msra.mxu0 %v708
    %748 = vmatprep.subr.bf16.mxu0 0
    %749 = vmatpush1.bf16.xpose.msra.mxu0 %v711
    %750 = vmatprep.subr.bf16.mxu0 0
    %751 = vmatpush1.bf16.xpose.msra.mxu0 %v714
    %752 = vmatprep.subr.bf16.mxu0 0
    %753 = vmatpush1.bf16.xpose.msra.mxu0 %v717
    %754 = vmatprep.subr.bf16.mxu0 0
    %755 = vmatpush1.bf16.xpose.msra.mxu0 %v720
    %756 = vmatprep.subr.bf16.mxu0 0
    %757 = vmatpush1.bf16.xpose.msra.mxu0 %v723
    %758 = vmatprep.subr.bf16.mxu0 0
    %759 = vmatpush1.bf16.xpose.msra.mxu0 %v726
    %760 = vmatprep.mubr.bf16.mxu0 0
    %761 = vmatmul.mubr.bf16.gmra.mrb[0].mxu0 %v678
    %v762 = vpop.f32.mrb[0].mxu0
    %v763 = vadd.f32 0.0, %v762
    %v764 = vpop.f32.mrb[0].mxu0
    %v765 = vadd.f32 0.0, %v764
    %v766 = vpop.f32.mrb[0].mxu0
    %v767 = vpop.f32.mrb[0].mxu0
    %768 = vdwg.mxu0
    %v769 = vpack.c.bf16 %v763, %v763
    %v770 = vpack.c.bf16 %v765, %v765
    %v773 = vcombine.low %v769, %v770
    %v775 = vunpack.c.l.s4 1983009808
    %v776 = vunpack.c.0.s8 %v775
    %v777 = vlaneseq
    %v778 = vshrl.u32 %v777, 7
    %v779 = vsub.s32 %v776, %v778
    %v780 = vrot.slane %v773, %v779
    %782 = vst [vmem:[#allocation10] sm:$0xf] %v780
    // Predicated region
    $region34: #{tpu_custom_call.1} parent=1 // pred_check
      _
    $region35: #{tpu_custom_call.1} parent=1 // pred_check_branch
      %784 = sbr.rel (0) target = $region37
    $region36: #{tpu_custom_call.1} parent=1 // pred_region
      %s786 = ssub.s32 64, 64
      %787 = vsyncadd [#allocation4], %s786
      %s789 = sshll.u32 [#allocation10], 4
      %s790 = int_to_ptr.vmem [resolvable:$true] %s789
      %792 = dma.vmem_to_hbm [thread:$0]  %s790, 64, %s4, [#allocation4]
    $region37: #{tpu_custom_call.1} parent=1 // pred_fallthru
      _
    // Predicated region
    $region38: #{tpu_custom_call.1} parent=1 // pred_check
      _
    $region39: #{tpu_custom_call.1} parent=1 // pred_check_branch
      %794 = sbr.rel (0) target = $region41
    $region40: #{tpu_custom_call.1} parent=1 // pred_region
      %795 = dma.done [#allocation4], 64
    $region41: #{tpu_custom_call.1} parent=1 // pred_fallthru
      _
    %796 = vsyncpa [#allocation3], 1
    %797 = vsyncpa [#allocation6], 1
    %798 = vsyncpa [#allocation9], 1
    %799 = vsyncpa [#allocation4], 1

</llo_original>
